<compile_context>
chip_gen: v5e
topology: v5e:2x2
jax: 0.10.0
libtpu: 0.0.40
codegen_flags: <defaults>
</compile_context>

<pallas_src>
import math
import functools

import jax
import jax.numpy as jnp
from jax.experimental import pallas as pl
from jax.experimental.pallas import tpu as pltpu

MAX_Q = 50


def _round_up(x, m):
    return (x + m - 1) // m * m


def _qnetwork_kernel(clip_q_function,
                     s_ref, a_ref,
                     w1s_ref, w1a_ref, b1_ref,
                     w2_ref, b2_ref,
                     w3_ref, b3_ref,
                     out_ref):
    # Layer 1 (both heads fused along the output dim; concat(state, action)
    # replaced by a row-split matmul — no out-of-kernel concat needed).
    h = (jnp.dot(s_ref[...], w1s_ref[...], preferred_element_type=jnp.float32)
         + jnp.dot(a_ref[...], w1a_ref[...], preferred_element_type=jnp.float32)
         + b1_ref[...])
    h = jnp.maximum(h, 0.0)

    # Layer 2 (block-diagonal fusion of w2 / w5): (TB, 2H) @ (2H, 2H)
    h = jnp.dot(h, w2_ref[...], preferred_element_type=jnp.float32) + b2_ref[...]
    h = jnp.maximum(h, 0.0)

    # Layer 3 (block-diagonal fusion of w3 / w6): (TB, 2H) @ (2H, 2) -> (TB, 2)
    q = jnp.dot(h, w3_ref[...], preferred_element_type=jnp.float32) + b3_ref[...]

    if clip_q_function:  # static Python flag, matches torch.min(x, MAX_Q)
        q = jnp.minimum(q, jnp.float32(MAX_Q))

    out_ref[...] = q.astype(out_ref.dtype)


def _pack_params(params, num_inputs):
    """Pack the 6 torch-style (in,out) Linear layers into fused twin-head mats."""
    H = params["w1"].shape[1]
    f32 = jnp.float32
    zH = jnp.zeros((H, H), f32)
    z1 = jnp.zeros((H, 1), f32)

    # layer 1: split by input rows (state rows / action rows), concat heads on cols
    w1s = jnp.concatenate([params["w1"][:num_inputs], params["w4"][:num_inputs]], axis=1)
    w1a = jnp.concatenate([params["w1"][num_inputs:], params["w4"][num_inputs:]], axis=1)
    b1 = jnp.concatenate([params["b1"], params["b4"]], axis=1)              # (1, 2H)

    # layer 2: block-diag(w2, w5) -> (2H, 2H)
    w2 = jnp.concatenate([
        jnp.concatenate([params["w2"], zH], axis=1),
        jnp.concatenate([zH, params["w5"]], axis=1),
    ], axis=0)
    b2 = jnp.concatenate([params["b2"], params["b5"]], axis=1)              # (1, 2H)

    # layer 3: block-diag(w3, w6) -> (2H, 2)
    w3 = jnp.concatenate([
        jnp.concatenate([params["w3"], z1], axis=1),
        jnp.concatenate([z1, params["w6"]], axis=1),
    ], axis=0)
    b3 = jnp.concatenate([params["b3"], params["b6"]], axis=1)              # (1, 2)

    return w1s, w1a, b1, w2, b2, w3, b3


def qnetwork_forward(state, action, params, clip_q_function=False):
    """Pallas TPU forward pass of the twin-Q network.

    state:  (B, num_inputs)  float32
    action: (B, num_actions) float32
    params: dict with w1..w6 ((in, out) f32, i.e. transposed vs nn.Linear) and
            b1..b6 ((1, out) f32).
    Returns (q1, q2), each (B, 1) float32.
    """
    state = state.astype(jnp.float32)
    action = action.astype(jnp.float32)
    B, num_inputs = state.shape
    num_actions = action.shape[1]
    D = num_inputs + num_actions
    H = params["w1"].shape[1]
    H2 = 2 * H

    w1s, w1a, b1, w2, b2, w3, b3 = _pack_params(params, num_inputs)

    # Batch tile: multiple of 8 sublanes, capped so weights + double-buffered
    # input/output tiles + activations stay well under the scoped VMEM limit
    # on every generation (v5e 16 MiB default, v7x 64 MiB physical).
    TB = min(512, _round_up(B, 8))
    B_pad = _round_up(B, TB)
    if B_pad != B:
        pad = B_pad - B
        state = jnp.pad(state, ((0, pad), (0, 0)))
        action = jnp.pad(action, ((0, pad), (0, 0)))
    grid = (B_pad // TB,)

    resident = lambda i: (0, 0)   # weights/biases: same block every grid step
    batched = lambda i: (i, 0)    # batch-tiled operands

    in_specs = [
        pl.BlockSpec((TB, num_inputs), batched),    # state tile
        pl.BlockSpec((TB, num_actions), batched),   # action tile
        pl.BlockSpec((num_inputs, H2), resident),   # w1 (state rows)
        pl.BlockSpec((num_actions, H2), resident),  # w1 (action rows)
        pl.BlockSpec((1, H2), resident),            # b1
        pl.BlockSpec((H2, H2), resident),           # w2 (block-diag)
        pl.BlockSpec((1, H2), resident),            # b2
        pl.BlockSpec((H2, 2), resident),            # w3 (block-diag)
        pl.BlockSpec((1, 2), resident),             # b3
    ]
    out_specs = pl.BlockSpec((TB, 2), batched)

    flops = 2 * B_pad * (num_inputs * H2 + num_actions * H2 + H2 * H2 + H2 * 2)
    weight_bytes = 4 * (D * H2 + H2 + H2 * H2 + H2 + H2 * 2 + 2)
    bytes_accessed = 4 * B_pad * D + weight_bytes + 4 * B_pad * 2

    out = pl.pallas_call(
        functools.partial(_qnetwork_kernel, clip_q_function),
        out_shape=jax.ShapeDtypeStruct((B_pad, 2), jnp.float32),
        grid=grid,
        in_specs=in_specs,
        out_specs=out_specs,
        compiler_params=pltpu.CompilerParams(
            dimension_semantics=("parallel",)),
        cost_estimate=pl.CostEstimate(
            flops=flops, transcendentals=0, bytes_accessed=bytes_accessed),
    )(state, action, w1s, w1a, b1, w2, b2, w3, b3)

    q1 = out[:B, 0:1]
    q2 = out[:B, 1:2]
    return q1, q2


def _xavier_uniform(key, fan_in, fan_out, gain=1.0):
    # matches torch.nn.init.xavier_uniform_ (gain=1); stored as (in, out)
    limit = gain * math.sqrt(6.0 / (fan_in + fan_out))
    return jax.random.uniform(key, (fan_in, fan_out), jnp.float32, -limit, limit)


def init_qnetwork_params(key, num_inputs, num_actions, hidden_dim):
    d = num_inputs + num_actions
    dims = [(d, hidden_dim), (hidden_dim, hidden_dim), (hidden_dim, 1),
            (d, hidden_dim), (hidden_dim, hidden_dim), (hidden_dim, 1)]
    keys = jax.random.split(key, len(dims))
    params = {}
    for i, ((fi, fo), k) in enumerate(zip(dims, keys), start=1):
        params[f"w{i}"] = _xavier_uniform(k, fi, fo)
        params[f"b{i}"] = jnp.zeros((1, fo), jnp.float32)  # constant_(bias, 0)
    return params


if __name__ == "__main__":
    B, num_inputs, num_actions, hidden_dim = 2, 8, 4, 32

    root = jax.random.PRNGKey(0)
    k_params, k_state, k_action = jax.random.split(root, 3)

    params = init_qnetwork_params(k_params, num_inputs, num_actions, hidden_dim)
    state = jax.random.normal(k_state, (B, num_inputs), jnp.float32)
    action = jax.random.normal(k_action, (B, num_actions), jnp.float32)

    fwd = jax.jit(functools.partial(qnetwork_forward, clip_q_function=True))
    q1, q2 = fwd(state, action, params)
    jax.block_until_ready((q1, q2))

    # reference check in plain JAX (unfused twin heads, like the PyTorch module)
    xu = jnp.concatenate([state, action], axis=1)
    h1 = jnp.maximum(xu @ params["w1"] + params["b1"], 0.0)
    h1 = jnp.maximum(h1 @ params["w2"] + params["b2"], 0.0)
    r1 = jnp.minimum(h1 @ params["w3"] + params["b3"], MAX_Q)
    h2 = jnp.maximum(xu @ params["w4"] + params["b4"], 0.0)
    h2 = jnp.maximum(h2 @ params["w5"] + params["b5"], 0.0)
    r2 = jnp.minimum(h2 @ params["w6"] + params["b6"], MAX_Q)
    assert q1.shape == (B, 1) and q2.shape == (B, 1)
    assert jnp.allclose(q1, r1, atol=1e-5) and jnp.allclose(q2, r2, atol=1e-5)

    # second sanity check at a larger, non-multiple-of-tile batch
    B2 = 1000
    ks2, ka2 = jax.random.split(jax.random.PRNGKey(7))
    s2 = jax.random.normal(ks2, (B2, num_inputs), jnp.float32)
    a2 = jax.random.normal(ka2, (B2, num_actions), jnp.float32)
    q1b, q2b = fwd(s2, a2, params)
    jax.block_until_ready((q1b, q2b))
    xu2 = jnp.concatenate([s2, a2], axis=1)
    g1 = jnp.maximum(xu2 @ params["w1"] + params["b1"], 0.0)
    g1 = jnp.maximum(g1 @ params["w2"] + params["b2"], 0.0)
    rr1 = jnp.minimum(g1 @ params["w3"] + params["b3"], MAX_Q)
    g2 = jnp.maximum(xu2 @ params["w4"] + params["b4"], 0.0)
    g2 = jnp.maximum(g2 @ params["w5"] + params["b5"], 0.0)
    rr2 = jnp.minimum(g2 @ params["w6"] + params["b6"], MAX_Q)
    assert q1b.shape == (B2, 1) and q2b.shape == (B2, 1)
    assert jnp.allclose(q1b, rr1, atol=1e-4) and jnp.allclose(q2b, rr2, atol=1e-4)

    print("KERNEL_OK")
</pallas_src>

<mosaic_0001>
module attributes {stable_mosaic.version = 11 : i64} {
  func.func @_qnetwork_kernel(%arg0: i32, %arg1: memref<8x8xf32, #tpu.memory_space<vmem>>, %arg2: memref<8x4xf32, #tpu.memory_space<vmem>>, %arg3: memref<8x64xf32, #tpu.memory_space<vmem>>, %arg4: memref<4x64xf32, #tpu.memory_space<vmem>>, %arg5: memref<1x64xf32, #tpu.memory_space<vmem>>, %arg6: memref<64x64xf32, #tpu.memory_space<vmem>>, %arg7: memref<1x64xf32, #tpu.memory_space<vmem>>, %arg8: memref<64x2xf32, #tpu.memory_space<vmem>>, %arg9: memref<1x2xf32, #tpu.memory_space<vmem>>, %arg10: memref<8x2xf32, #tpu.memory_space<vmem>>) attributes {dimension_semantics = [#tpu.dimension_semantics<parallel>], iteration_bounds = array<i64: 1>, scalar_prefetch = 0 : i64, scratch_operands = 0 : i64, tpu.core_type = #tpu.core_type<tc>, window_params = [{transform_indices = @transform_0, window_bounds = array<i64: 8, 8>}, {transform_indices = @transform_1, window_bounds = array<i64: 8, 4>}, {pipeline_mode = #tpu.pipeline_mode<synchronous>, transform_indices = @transform_2, window_bounds = array<i64: 8, 64>}, {pipeline_mode = #tpu.pipeline_mode<synchronous>, transform_indices = @transform_3, window_bounds = array<i64: 4, 64>}, {pipeline_mode = #tpu.pipeline_mode<synchronous>, transform_indices = @transform_4, window_bounds = array<i64: 1, 64>}, {pipeline_mode = #tpu.pipeline_mode<synchronous>, transform_indices = @transform_5, window_bounds = array<i64: 64, 64>}, {pipeline_mode = #tpu.pipeline_mode<synchronous>, transform_indices = @transform_6, window_bounds = array<i64: 1, 64>}, {pipeline_mode = #tpu.pipeline_mode<synchronous>, transform_indices = @transform_7, window_bounds = array<i64: 64, 2>}, {pipeline_mode = #tpu.pipeline_mode<synchronous>, transform_indices = @transform_8, window_bounds = array<i64: 1, 2>}, {transform_indices = @transform_9, window_bounds = array<i64: 8, 2>}]} {
    %c0 = arith.constant 0 : index
    %c0_0 = arith.constant 0 : index
    %0 = vector.load %arg1[%c0, %c0_0] : memref<8x8xf32, #tpu.memory_space<vmem>>, vector<8x8xf32>
    %c0_1 = arith.constant 0 : index
    %c0_2 = arith.constant 0 : index
    %1 = vector.load %arg3[%c0_1, %c0_2] : memref<8x64xf32, #tpu.memory_space<vmem>>, vector<8x64xf32>
    %cst = arith.constant dense<0.000000e+00> : vector<8x64xf32>
    %2 = tpu.matmul %0, %1, %cst {dimension_numbers = #tpu.dot_dimension_numbers<[1], [0], [0], [1], [0, 0, 1, 1], [], []>} : vector<8x8xf32>, vector<8x64xf32>, vector<8x64xf32> -> vector<8x64xf32>
    %c0_3 = arith.constant 0 : index
    %c0_4 = arith.constant 0 : index
    %3 = vector.load %arg2[%c0_3, %c0_4] : memref<8x4xf32, #tpu.memory_space<vmem>>, vector<8x4xf32>
    %c0_5 = arith.constant 0 : index
    %c0_6 = arith.constant 0 : index
    %4 = vector.load %arg4[%c0_5, %c0_6] : memref<4x64xf32, #tpu.memory_space<vmem>>, vector<4x64xf32>
    %cst_7 = arith.constant dense<0.000000e+00> : vector<8x64xf32>
    %5 = tpu.matmul %3, %4, %cst_7 {dimension_numbers = #tpu.dot_dimension_numbers<[1], [0], [0], [1], [0, 0, 1, 1], [], []>} : vector<8x4xf32>, vector<4x64xf32>, vector<8x64xf32> -> vector<8x64xf32>
    %6 = arith.addf %2, %5 : vector<8x64xf32>
    %c0_8 = arith.constant 0 : index
    %c0_9 = arith.constant 0 : index
    %7 = vector.load %arg5[%c0_8, %c0_9] : memref<1x64xf32, #tpu.memory_space<vmem>>, vector<1x64xf32>
    %8 = vector.broadcast %7 : vector<1x64xf32> to vector<8x64xf32>
    %9 = arith.addf %6, %8 : vector<8x64xf32>
    %cst_10 = arith.constant 0.000000e+00 : f32
    %10 = vector.broadcast %cst_10 : f32 to vector<8x64xf32>
    %11 = arith.maximumf %9, %10 : vector<8x64xf32>
    %c0_11 = arith.constant 0 : index
    %c0_12 = arith.constant 0 : index
    %12 = vector.load %arg6[%c0_11, %c0_12] : memref<64x64xf32, #tpu.memory_space<vmem>>, vector<64x64xf32>
    %cst_13 = arith.constant dense<0.000000e+00> : vector<8x64xf32>
    %13 = tpu.matmul %11, %12, %cst_13 {dimension_numbers = #tpu.dot_dimension_numbers<[1], [0], [0], [1], [0, 0, 1, 1], [], []>} : vector<8x64xf32>, vector<64x64xf32>, vector<8x64xf32> -> vector<8x64xf32>
    %c0_14 = arith.constant 0 : index
    %c0_15 = arith.constant 0 : index
    %14 = vector.load %arg7[%c0_14, %c0_15] : memref<1x64xf32, #tpu.memory_space<vmem>>, vector<1x64xf32>
    %15 = vector.broadcast %14 : vector<1x64xf32> to vector<8x64xf32>
    %16 = arith.addf %13, %15 : vector<8x64xf32>
    %cst_16 = arith.constant 0.000000e+00 : f32
    %17 = vector.broadcast %cst_16 : f32 to vector<8x64xf32>
    %18 = arith.maximumf %16, %17 : vector<8x64xf32>
    %c0_17 = arith.constant 0 : index
    %c0_18 = arith.constant 0 : index
    %19 = vector.load %arg8[%c0_17, %c0_18] : memref<64x2xf32, #tpu.memory_space<vmem>>, vector<64x2xf32>
    %cst_19 = arith.constant dense<0.000000e+00> : vector<8x2xf32>
    %20 = tpu.matmul %18, %19, %cst_19 {dimension_numbers = #tpu.dot_dimension_numbers<[1], [0], [0], [1], [0, 0, 1, 1], [], []>} : vector<8x64xf32>, vector<64x2xf32>, vector<8x2xf32> -> vector<8x2xf32>
    %c0_20 = arith.constant 0 : index
    %c0_21 = arith.constant 0 : index
    %21 = vector.load %arg9[%c0_20, %c0_21] : memref<1x2xf32, #tpu.memory_space<vmem>>, vector<1x2xf32>
    %22 = vector.broadcast %21 : vector<1x2xf32> to vector<8x2xf32>
    %23 = arith.addf %20, %22 : vector<8x2xf32>
    %cst_22 = arith.constant 5.000000e+01 : f32
    %24 = vector.broadcast %cst_22 : f32 to vector<8x2xf32>
    %25 = arith.minimumf %23, %24 : vector<8x2xf32>
    %c0_23 = arith.constant 0 : index
    %c0_24 = arith.constant 0 : index
    %26 = vector.load %arg10[%c0_23, %c0_24] : memref<8x2xf32, #tpu.memory_space<vmem>>, vector<8x2xf32>
    tpu.vector_store %arg10[%c0_23, %c0_24], %25 {strides = array<i32>} : memref<8x2xf32, #tpu.memory_space<vmem>>, vector<8x2xf32>,
    return
  }
  func.func @transform_0(%arg0: i32) -> (i32, i32) {
    %c0_i32 = arith.constant 0 : i32
    %c0_i32_0 = arith.constant 0 : i32
    return %arg0, %c0_i32 : i32, i32
  }
  func.func @transform_1(%arg0: i32) -> (i32, i32) {
    %c0_i32 = arith.constant 0 : i32
    %c0_i32_0 = arith.constant 0 : i32
    return %arg0, %c0_i32 : i32, i32
  }
  func.func @transform_2(%arg0: i32) -> (i32, i32) {
    %c0_i32 = arith.constant 0 : i32
    %c0_i32_0 = arith.constant 0 : i32
    %c0_i32_1 = arith.constant 0 : i32
    return %c0_i32, %c0_i32_0 : i32, i32
  }
  func.func @transform_3(%arg0: i32) -> (i32, i32) {
    %c0_i32 = arith.constant 0 : i32
    %c0_i32_0 = arith.constant 0 : i32
    %c0_i32_1 = arith.constant 0 : i32
    return %c0_i32, %c0_i32_0 : i32, i32
  }
  func.func @transform_4(%arg0: i32) -> (i32, i32) {
    %c0_i32 = arith.constant 0 : i32
    %c0_i32_0 = arith.constant 0 : i32
    %c0_i32_1 = arith.constant 0 : i32
    return %c0_i32, %c0_i32_0 : i32, i32
  }
  func.func @transform_5(%arg0: i32) -> (i32, i32) {
    %c0_i32 = arith.constant 0 : i32
    %c0_i32_0 = arith.constant 0 : i32
    %c0_i32_1 = arith.constant 0 : i32
    return %c0_i32, %c0_i32_0 : i32, i32
  }
  func.func @transform_6(%arg0: i32) -> (i32, i32) {
    %c0_i32 = arith.constant 0 : i32
    %c0_i32_0 = arith.constant 0 : i32
    %c0_i32_1 = arith.constant 0 : i32
    return %c0_i32, %c0_i32_0 : i32, i32
  }
  func.func @transform_7(%arg0: i32) -> (i32, i32) {
    %c0_i32 = arith.constant 0 : i32
    %c0_i32_0 = arith.constant 0 : i32
    %c0_i32_1 = arith.constant 0 : i32
    return %c0_i32, %c0_i32_0 : i32, i32
  }
  func.func @transform_8(%arg0: i32) -> (i32, i32) {
    %c0_i32 = arith.constant 0 : i32
    %c0_i32_0 = arith.constant 0 : i32
    %c0_i32_1 = arith.constant 0 : i32
    return %c0_i32, %c0_i32_0 : i32, i32
  }
  func.func @transform_9(%arg0: i32) -> (i32, i32) {
    %c0_i32 = arith.constant 0 : i32
    %c0_i32_0 = arith.constant 0 : i32
    return %arg0, %c0_i32 : i32, i32
  }
}

</mosaic_0001>

<llo_original>
// kernel: qnetwork_forward.1
$region0: #{qnetwork_forward.1}
  #allocation0 [shape = 'u32[]', space=smem, size = 0x4, offset = 0x4, fixed_abs, tag = 'smem constant byte address 0x4 - core index']
  #allocation1 [shape = 'u32[72,128]{1,0:T(1,128)}', space=vmem, size = 0x9000, scoped, tag = 'internal scratch']
  %s0 = inlined_call_operand.vmem [shape: f32[8,8], index: 0, kind: input, shape index: {}]
  %s1 = inlined_call_operand.vmem [shape: f32[8,4], index: 1, kind: input, shape index: {}]
  %s2 = inlined_call_operand.vmem [shape: f32[8,64], index: 2, kind: input, shape index: {}]
  %s3 = inlined_call_operand.vmem [shape: f32[4,64], index: 3, kind: input, shape index: {}]
  %s4 = inlined_call_operand.vmem [shape: f32[1,64], index: 4, kind: input, shape index: {}]
  %s5 = inlined_call_operand.vmem [shape: f32[64,64], index: 5, kind: input, shape index: {}]
  %s6 = inlined_call_operand.vmem [shape: f32[1,64], index: 6, kind: input, shape index: {}]
  %s7 = inlined_call_operand.vmem [shape: f32[64,2], index: 7, kind: input, shape index: {}]
  %s8 = inlined_call_operand.vmem [shape: f32[1,2], index: 8, kind: input, shape index: {}]
  %s9 = inlined_call_operand.vmem [shape: f32[8,2], index: 9, kind: output, shape index: {}]
  %s10 = sld [smem:[#allocation0]]
  $region46: #{qnetwork_forward.1} parent=0
    _
  %s12 = ssub.s32 1, %s10
  %s13 = scalar_select 0, %s12, %s10
  // Predicated region
  $region2: #{qnetwork_forward.1} parent=0 // pred_check
    _
  $region3: #{qnetwork_forward.1} parent=0 // pred_check_branch
    %15 = sbr.rel (0) target = $region5
  $region4: #{qnetwork_forward.1} parent=0 // pred_region
    _
  $region5: #{qnetwork_forward.1} parent=0 // pred_fallthru
    _
  // Predicated region
  $region6: #{qnetwork_forward.1} parent=0 // pred_check
    _
  $region7: #{qnetwork_forward.1} parent=0 // pred_check_branch
    %17 = sbr.rel (0) target = $region9
  $region8: #{qnetwork_forward.1} parent=0 // pred_region
    _
  $region9: #{qnetwork_forward.1} parent=0 // pred_fallthru
    _
  // Predicated region
  $region10: #{qnetwork_forward.1} parent=0 // pred_check
    _
  $region11: #{qnetwork_forward.1} parent=0 // pred_check_branch
    %19 = sbr.rel (0) target = $region13
  $region12: #{qnetwork_forward.1} parent=0 // pred_region
    _
  $region13: #{qnetwork_forward.1} parent=0 // pred_fallthru
    _
  // Predicated region
  $region14: #{qnetwork_forward.1} parent=0 // pred_check
    _
  $region15: #{qnetwork_forward.1} parent=0 // pred_check_branch
    %21 = sbr.rel (0) target = $region17
  $region16: #{qnetwork_forward.1} parent=0 // pred_region
    _
  $region17: #{qnetwork_forward.1} parent=0 // pred_fallthru
    _
  // Predicated region
  $region18: #{qnetwork_forward.1} parent=0 // pred_check
    _
  $region19: #{qnetwork_forward.1} parent=0 // pred_check_branch
    %23 = sbr.rel (0) target = $region21
  $region20: #{qnetwork_forward.1} parent=0 // pred_region
    _
  $region21: #{qnetwork_forward.1} parent=0 // pred_fallthru
    _
  // Predicated region
  $region22: #{qnetwork_forward.1} parent=0 // pred_check
    _
  $region23: #{qnetwork_forward.1} parent=0 // pred_check_branch
    %25 = sbr.rel (0) target = $region25
  $region24: #{qnetwork_forward.1} parent=0 // pred_region
    _
  $region25: #{qnetwork_forward.1} parent=0 // pred_fallthru
    _
  // Predicated region
  $region26: #{qnetwork_forward.1} parent=0 // pred_check
    _
  $region27: #{qnetwork_forward.1} parent=0 // pred_check_branch
    %27 = sbr.rel (0) target = $region29
  $region28: #{qnetwork_forward.1} parent=0 // pred_region
    _
  $region29: #{qnetwork_forward.1} parent=0 // pred_fallthru
    _
  // Predicated region
  $region30: #{qnetwork_forward.1} parent=0 // pred_check
    _
  $region31: #{qnetwork_forward.1} parent=0 // pred_check_branch
    %29 = sbr.rel (0) target = $region33
  $region32: #{qnetwork_forward.1} parent=0 // pred_region
    _
  $region33: #{qnetwork_forward.1} parent=0 // pred_fallthru
    _
  // Predicated region
  $region34: #{qnetwork_forward.1} parent=0 // pred_check
    _
  $region35: #{qnetwork_forward.1} parent=0 // pred_check_branch
    %31 = sbr.rel (0) target = $region37
  $region36: #{qnetwork_forward.1} parent=0 // pred_region
    _
  $region37: #{qnetwork_forward.1} parent=0 // pred_fallthru
    _
  %v32 = vld [vmem:[%s0] sm:$0xff]
  %v33 = vld [vmem:[%s2] sm:$0xff]
  %v34 = vld [vmem:[%s1] sm:$0xff]
  %v35 = vld [vmem:[%s3] sm:$0xf]
  %vm36 = vcmask 31744
  %v38 = vsel %vm36, %v34, 0
  %vm40 = vcmask 1043456
  %v42 = vsel %vm40, %v35, 0
  %44 = vmatpush.msra.mxu0 0.0
  %45 = vmatpush.msra.mxu0 0.0
  %46 = vmatpush.msra.mxu0 0.0
  %47 = vmatpush.msra.mxu0 0.0
  %48 = vmatpush.msra.mxu0 0.0
  %49 = vmatpush.msra.mxu0 0.0
  %50 = vmatpush.msra.mxu0 0.0
  %51 = vmatpush.msra.mxu0 0.0
  %52 = vmatpush.msra.mxu0 0.0
  %53 = vmatpush.msra.mxu0 0.0
  %54 = vmatpush.msra.mxu0 0.0
  %55 = vmatpush.msra.mxu0 0.0
  %56 = vmatpush.msra.mxu0 0.0
  %57 = vmatpush.msra.mxu0 0.0
  %58 = vmatpush.msra.mxu0 0.0
  %59 = vmatpush.msra.mxu0 %v42
  %60 = vmatmul.f32.gmra.mxu0 %v38
  %v61 = vpop.f32.mrf.mxu0
  %v62 = vadd.f32 0.0, %v61
  %63 = vdwg.mxu0
  %vm64 = vcmask 64512
  %v66 = vsel %vm64, %v32, 0
  %68 = vmatpush.msra.mxu0 0.0
  %69 = vmatpush.msra.mxu0 0.0
  %70 = vmatpush.msra.mxu0 0.0
  %71 = vmatpush.msra.mxu0 0.0
  %72 = vmatpush.msra.mxu0 0.0
  %73 = vmatpush.msra.mxu0 0.0
  %74 = vmatpush.msra.mxu0 0.0
  %75 = vmatpush.msra.mxu0 0.0
  %76 = vmatpush.msra.mxu0 0.0
  %77 = vmatpush.msra.mxu0 0.0
  %78 = vmatpush.msra.mxu0 0.0
  %79 = vmatpush.msra.mxu0 0.0
  %80 = vmatpush.msra.mxu0 0.0
  %81 = vmatpush.msra.mxu0 0.0
  %82 = vmatpush.msra.mxu0 0.0
  %83 = vmatpush.msra.mxu0 %v33
  %84 = vmatmul.f32.gmra.mxu0 %v66
  %v85 = vpop.f32.mrf.mxu0
  %v86 = vadd.f32 %v62, %v85
  %87 = vdwg.mxu0
  %v88 = vld [vmem:[%s4] sm:$0x1]
  %v90 = vperm.slane %v88, 0
  %v92 = vadd.f32 %v86, %v90
  %v93 = vmax.f32 %v92, 0.0
  %v94 = vld [vmem:[%s5] sm:$0xff]
  %v95 = vld [vmem:[%s5 + $0x8] sm:$0xff]
  %v96 = vld [vmem:[%s5 + $0x10] sm:$0xff]
  %v97 = vld [vmem:[%s5 + $0x18] sm:$0xff]
  %v98 = vld [vmem:[%s5 + $0x20] sm:$0xff]
  %v99 = vld [vmem:[%s5 + $0x28] sm:$0xff]
  %v100 = vld [vmem:[%s5 + $0x30] sm:$0xff]
  %v101 = vld [vmem:[%s5 + $0x38] sm:$0xff]
  %v102 = vld [vmem:[%s6] sm:$0x1]
  %v104 = vperm.slane %v102, 0
  %vm106 = vcmask 523264
  %v108 = vsel %vm106, %v93, 0
  %110 = vmatpush.msra.mxu0 0.0
  %111 = vmatpush.msra.mxu0 0.0
  %112 = vmatpush.msra.mxu0 0.0
  %113 = vmatpush.msra.mxu0 0.0
  %114 = vmatpush.msra.mxu0 0.0
  %115 = vmatpush.msra.mxu0 0.0
  %116 = vmatpush.msra.mxu0 0.0
  %117 = vmatpush.msra.mxu0 0.0
  %118 = vmatpush.msra.mxu0 %v101
  %119 = vmatpush.msra.mxu0 %v100
  %120 = vmatpush.msra.mxu0 %v99
  %121 = vmatpush.msra.mxu0 %v98
  %122 = vmatpush.msra.mxu0 %v97
  %123 = vmatpush.msra.mxu0 %v96
  %124 = vmatpush.msra.mxu0 %v95
  %125 = vmatpush.msra.mxu0 %v94
  %126 = vmatmul.f32.gmra.mxu0 %v108
  %v127 = vpop.f32.mrf.mxu0
  %v128 = vadd.f32 %v104, %v127
  %129 = vdwg.mxu0
  %v130 = vmax.f32 %v128, 0.0
  %v131 = vld [vmem:[%s7] sm:$0xff]
  %v132 = vld [vmem:[%s7 + $0x8] sm:$0xff]
  %v133 = vld [vmem:[%s7 + $0x10] sm:$0xff]
  %v134 = vld [vmem:[%s7 + $0x18] sm:$0xff]
  %v135 = vld [vmem:[%s7 + $0x20] sm:$0xff]
  %v136 = vld [vmem:[%s7 + $0x28] sm:$0xff]
  %v137 = vld [vmem:[%s7 + $0x30] sm:$0xff]
  %v138 = vld [vmem:[%s7 + $0x38] sm:$0xff]
  %v139 = vld [vmem:[%s8] sm:$0x1]
  %v141 = vperm.slane %v139, 0
  %v144 = vsel %vm106, %v130, 0
  %146 = vmatpush.msra.mxu0 0.0
  %147 = vmatpush.msra.mxu0 0.0
  %148 = vmatpush.msra.mxu0 0.0
  %149 = vmatpush.msra.mxu0 0.0
  %150 = vmatpush.msra.mxu0 0.0
  %151 = vmatpush.msra.mxu0 0.0
  %152 = vmatpush.msra.mxu0 0.0
  %153 = vmatpush.msra.mxu0 0.0
  %154 = vmatpush.msra.mxu0 %v138
  %155 = vmatpush.msra.mxu0 %v137
  %156 = vmatpush.msra.mxu0 %v136
  %157 = vmatpush.msra.mxu0 %v135
  %158 = vmatpush.msra.mxu0 %v134
  %159 = vmatpush.msra.mxu0 %v133
  %160 = vmatpush.msra.mxu0 %v132
  %161 = vmatpush.msra.mxu0 %v131
  %162 = vmatmul.f32.gmra.mxu0 %v144
  %v163 = vpop.f32.mrf.mxu0
  %v164 = vadd.f32 %v141, %v163
  %165 = vdwg.mxu0
  %v166 = vmin.f32 %v164, 50.0
  %vm167 = vcmask 15360
  %168 = vst.msk [vmem:[%s9] sm:$0xff] %vm167, %v166
  // Predicated region
  $region38: #{qnetwork_forward.1} parent=0 // pred_check
    _
  $region39: #{qnetwork_forward.1} parent=0 // pred_check_branch
    %170 = sbr.rel (0) target = $region41
  $region40: #{qnetwork_forward.1} parent=0 // pred_region
    _
  $region41: #{qnetwork_forward.1} parent=0 // pred_fallthru
    _
  // Predicated region
  $region42: #{qnetwork_forward.1} parent=0 // pred_check
    _
  $region43: #{qnetwork_forward.1} parent=0 // pred_check_branch
    %172 = sbr.rel (0) target = $region45
  $region44: #{qnetwork_forward.1} parent=0 // pred_region
    _
  $region45: #{qnetwork_forward.1} parent=0 // pred_fallthru
    _

</llo_original>
